<compile_context>
chip_gen: v6e
topology: v6e:2x2x1
jax: 0.10.0
libtpu: 0.0.40
codegen_flags: <defaults>
</compile_context>

<pallas_src>
import functools

import jax
import jax.numpy as jnp
from jax.experimental import pallas as pl
from jax.experimental.pallas import tpu as pltpu


def _round_up(n, m):
    return ((n + m - 1) // m) * m


def _fused_perceptrons_kernel(x_ref, w_in_ref, b_in_ref, w_hid_ref, b_hid_ref,
                              w_out_ref, b_out_ref, o_ref, *,
                              leaky_coef, n_hidden_layers):
    """One batch tile: all P perceptrons fused via lane-packed / block-diagonal weights."""
    # input layer + leaky_relu : (TB, D_pad) @ (D_pad, PH_pad)
    h = jnp.dot(x_ref[...], w_in_ref[...], preferred_element_type=jnp.float32)
    h = h + b_in_ref[...]
    h = jnp.where(h >= 0, h, leaky_coef * h)

    # hidden layers (block-diagonal) + leaky_relu; one layer's weights live at a time
    for l in range(n_hidden_layers):
        h = jnp.dot(h, w_hid_ref[l], preferred_element_type=jnp.float32) + b_hid_ref[l]
        h = jnp.where(h >= 0, h, leaky_coef * h)

    # output layer (block-structured): (TB, PH_pad) @ (PH_pad, P_pad) -> lane-dense write
    o_ref[...] = (jnp.dot(h, w_out_ref[...], preferred_element_type=jnp.float32)
                  + b_out_ref[...])


def _pack_params(params):
    """Pack stacked per-perceptron params into lane-packed / block-diagonal form."""
    w_in, b_in, w_hid, b_hid, w_out, b_out = params
    P, D_in, H = w_in.shape
    L = w_hid.shape[1]
    PH = P * H
    PH_pad = _round_up(PH, 128)
    P_pad = _round_up(P, 128)
    D_pad = _round_up(D_in, 128)
    L_store = max(L, 1)
    idx = jnp.arange(P)

    # W_in: (P, D_in, H) -> (D_pad, PH_pad); perceptron blocks concatenated along lanes.
    w_in_p = jnp.zeros((D_pad, PH_pad), jnp.float32)
    w_in_p = w_in_p.at[:D_in, :PH].set(
        jnp.transpose(w_in, (1, 0, 2)).reshape(D_in, PH).astype(jnp.float32))
    # b_in: (P, 1, H) -> (1, PH_pad)
    b_in_p = jnp.zeros((1, PH_pad), jnp.float32)
    b_in_p = b_in_p.at[0, :PH].set(b_in.reshape(PH).astype(jnp.float32))

    # W_hid: (P, L, H, H) -> block diagonal (L_store, PH_pad, PH_pad) via one scatter.
    w_hid_p = jnp.zeros((L_store, PH_pad, PH_pad), jnp.float32)
    if L > 0:
        bd = jnp.zeros((L, P, H, P, H), jnp.float32)
        # advanced indices non-adjacent -> result axes (P, L, H, H) == w_hid layout
        bd = bd.at[:, idx, :, idx, :].set(w_hid.astype(jnp.float32))
        w_hid_p = w_hid_p.at[:L, :PH, :PH].set(bd.reshape(L, PH, PH))
    # b_hid: (P, L, H) -> (L_store, 1, PH_pad)
    b_hid_p = jnp.zeros((L_store, 1, PH_pad), jnp.float32)
    if L > 0:
        b_hid_p = b_hid_p.at[:L, 0, :PH].set(
            jnp.transpose(b_hid, (1, 0, 2)).reshape(L, PH).astype(jnp.float32))

    # W_out: (P, H, 1) -> block-structured (PH_pad, P_pad) via one scatter.
    wo = jnp.zeros((P, H, P), jnp.float32)
    wo = wo.at[idx, :, idx].set(w_out[:, :, 0].astype(jnp.float32))
    w_out_p = jnp.zeros((PH_pad, P_pad), jnp.float32)
    w_out_p = w_out_p.at[:PH, :P].set(wo.reshape(PH, P))
    # b_out: (P, 1, 1) -> (1, P_pad)
    b_out_p = jnp.zeros((1, P_pad), jnp.float32)
    b_out_p = b_out_p.at[0, :P].set(b_out[:, 0, 0].astype(jnp.float32))

    packed = (w_in_p, b_in_p, w_hid_p, b_hid_p, w_out_p, b_out_p)
    return packed, (P, D_in, H, L, D_pad, PH_pad, P_pad)


def parallel_perceptrons_forward(x, params, leaky_relu_coef=0.2):
    """JAX/Pallas equivalent of ParallelPerceptrons.forward."""
    squeeze = (x.ndim == 1)
    if squeeze:
        x = x[None, :]
    x = x.astype(jnp.float32)

    packed, (P, D_in, H, L, D_pad, PH_pad, P_pad) = _pack_params(params)
    w_in_p, b_in_p, w_hid_p, b_hid_p, w_out_p, b_out_p = packed
    L_store = w_hid_p.shape[0]

    B = x.shape[0]
    # batch tile: up to 512 rows per grid step, sublane-aligned
    TB = min(_round_up(B, 8), 512)
    B_pad = _round_up(B, TB)
    if (B_pad != B) or (D_pad != D_in):
        x = jnp.pad(x, ((0, B_pad - B), (0, D_pad - D_in)))

    grid = (B_pad // TB,)

    out = pl.pallas_call(
        functools.partial(_fused_perceptrons_kernel,
                          leaky_coef=leaky_relu_coef,
                          n_hidden_layers=L),
        out_shape=jax.ShapeDtypeStruct((B_pad, P_pad), jnp.float32),
        grid=grid,
        in_specs=[
            pl.BlockSpec((TB, D_pad), lambda i: (i, 0)),                    # x (batch-tiled)
            pl.BlockSpec((D_pad, PH_pad), lambda i: (0, 0)),                # packed W_in
            pl.BlockSpec((1, PH_pad), lambda i: (0, 0)),                    # packed b_in
            pl.BlockSpec((L_store, PH_pad, PH_pad), lambda i: (0, 0, 0)),   # block-diag W_hid
            pl.BlockSpec((L_store, 1, PH_pad), lambda i: (0, 0, 0)),        # packed b_hid
            pl.BlockSpec((PH_pad, P_pad), lambda i: (0, 0)),                # block-struct W_out
            pl.BlockSpec((1, P_pad), lambda i: (0, 0)),                     # packed b_out
        ],
        out_specs=pl.BlockSpec((TB, P_pad), lambda i: (i, 0)),
        compiler_params=pltpu.CompilerParams(
            dimension_semantics=("parallel",)),
    )(x, w_in_p, b_in_p, w_hid_p, b_hid_p, w_out_p, b_out_p)

    out = out[:B, :P]          # drop lane/sublane padding -> (B, P)
    if squeeze:
        out = out[0]           # (P,) == torch.cat([...], dim=0)
    return out


def init_params(key, dim_input, dim_hidden, n_hidden_layers, dim_output):
    """Deterministic parameter init (stacked along leading perceptron axis)."""
    ks = jax.random.split(key, 6)
    P, D, H, L = dim_output, dim_input, dim_hidden, n_hidden_layers
    scale_in = 1.0 / jnp.sqrt(D)
    scale_h = 1.0 / jnp.sqrt(H)
    w_in = jax.random.normal(ks[0], (P, D, H), jnp.float32) * scale_in
    b_in = jax.random.normal(ks[1], (P, 1, H), jnp.float32) * scale_in
    w_hid = jax.random.normal(ks[2], (P, L, H, H), jnp.float32) * scale_h
    b_hid = jax.random.normal(ks[3], (P, L, H), jnp.float32) * scale_h
    w_out = jax.random.normal(ks[4], (P, H, 1), jnp.float32) * scale_h
    b_out = jax.random.normal(ks[5], (P, 1, 1), jnp.float32) * scale_h
    return (w_in, b_in, w_hid, b_hid, w_out, b_out)


def reference_forward(x, params, leaky_relu_coef=0.2):
    """Pure-JAX reference mirroring the PyTorch module semantics."""
    w_in, b_in, w_hid, b_hid, w_out, b_out = params
    squeeze = (x.ndim == 1)
    if squeeze:
        x = x[None, :]
    outs = []
    for p in range(w_in.shape[0]):
        h = x @ w_in[p] + b_in[p, 0]
        h = jnp.where(h >= 0, h, leaky_relu_coef * h)
        for l in range(w_hid.shape[1]):
            h = h @ w_hid[p, l] + b_hid[p, l]
            h = jnp.where(h >= 0, h, leaky_relu_coef * h)
        outs.append(h @ w_out[p] + b_out[p, 0])
    out = jnp.concatenate(outs, axis=1)
    if squeeze:
        out = out[0]
    return out


if __name__ == "__main__":
    batch = 2
    dim_input = 8
    dim_hidden = 32
    n_hidden_layers = 2
    dim_output = 3
    leaky_relu_coef = 0.2  # ParallelPerceptrons default

    key = jax.random.PRNGKey(0)
    k_x, k_p = jax.random.split(key)
    x = jax.random.normal(k_x, (batch, dim_input), jnp.float32)
    params = init_params(k_p, dim_input, dim_hidden, n_hidden_layers, dim_output)

    # 2-D batch path
    y = jax.block_until_ready(parallel_perceptrons_forward(x, params, leaky_relu_coef))
    y_ref = reference_forward(x, params, leaky_relu_coef)
    assert y.shape == (batch, dim_output), y.shape
    assert jnp.allclose(y, y_ref, atol=1e-4, rtol=1e-4), (y, y_ref)

    # 1-D input path (torch.cat dim=0 case)
    y1 = jax.block_until_ready(parallel_perceptrons_forward(x[0], params, leaky_relu_coef))
    y1_ref = reference_forward(x[0], params, leaky_relu_coef)
    assert y1.shape == (dim_output,), y1.shape
    assert jnp.allclose(y1, y1_ref, atol=1e-4, rtol=1e-4), (y1, y1_ref)

    # larger batch to exercise the multi-step (pipelined) grid path
    xb = jax.random.normal(k_x, (600, dim_input), jnp.float32)
    yb = jax.block_until_ready(parallel_perceptrons_forward(xb, params, leaky_relu_coef))
    yb_ref = reference_forward(xb, params, leaky_relu_coef)
    assert yb.shape == (600, dim_output), yb.shape
    assert jnp.allclose(yb, yb_ref, atol=1e-4, rtol=1e-4)

    print("KERNEL_OK")
</pallas_src>

<mosaic_0001>
module attributes {stable_mosaic.version = 11 : i64} {
  func.func @_fused_perceptrons_kernel(%arg0: i32, %arg1: memref<8x128xf32, #tpu.memory_space<vmem>>, %arg2: memref<128x128xf32, #tpu.memory_space<vmem>>, %arg3: memref<1x128xf32, #tpu.memory_space<vmem>>, %arg4: memref<2x128x128xf32, #tpu.memory_space<vmem>>, %arg5: memref<2x1x128xf32, #tpu.memory_space<vmem>>, %arg6: memref<128x128xf32, #tpu.memory_space<vmem>>, %arg7: memref<1x128xf32, #tpu.memory_space<vmem>>, %arg8: memref<8x128xf32, #tpu.memory_space<vmem>>) attributes {dimension_semantics = [#tpu.dimension_semantics<parallel>], iteration_bounds = array<i64: 1>, scalar_prefetch = 0 : i64, scratch_operands = 0 : i64, tpu.core_type = #tpu.core_type<tc>, window_params = [{transform_indices = @transform_0, window_bounds = array<i64: 8, 128>}, {pipeline_mode = #tpu.pipeline_mode<synchronous>, transform_indices = @transform_1, window_bounds = array<i64: 128, 128>}, {pipeline_mode = #tpu.pipeline_mode<synchronous>, transform_indices = @transform_2, window_bounds = array<i64: 1, 128>}, {pipeline_mode = #tpu.pipeline_mode<synchronous>, transform_indices = @transform_3, window_bounds = array<i64: 2, 128, 128>}, {pipeline_mode = #tpu.pipeline_mode<synchronous>, transform_indices = @transform_4, window_bounds = array<i64: 2, 1, 128>}, {pipeline_mode = #tpu.pipeline_mode<synchronous>, transform_indices = @transform_5, window_bounds = array<i64: 128, 128>}, {pipeline_mode = #tpu.pipeline_mode<synchronous>, transform_indices = @transform_6, window_bounds = array<i64: 1, 128>}, {transform_indices = @transform_7, window_bounds = array<i64: 8, 128>}]} {
    %c0 = arith.constant 0 : index
    %c0_0 = arith.constant 0 : index
    %0 = vector.load %arg1[%c0, %c0_0] : memref<8x128xf32, #tpu.memory_space<vmem>>, vector<8x128xf32>
    %c0_1 = arith.constant 0 : index
    %c0_2 = arith.constant 0 : index
    %1 = vector.load %arg2[%c0_1, %c0_2] : memref<128x128xf32, #tpu.memory_space<vmem>>, vector<128x128xf32>
    %cst = arith.constant dense<0.000000e+00> : vector<8x128xf32>
    %2 = tpu.matmul %0, %1, %cst {dimension_numbers = #tpu.dot_dimension_numbers<[1], [0], [0], [1], [0, 0, 1, 1], [], []>} : vector<8x128xf32>, vector<128x128xf32>, vector<8x128xf32> -> vector<8x128xf32>
    %c0_3 = arith.constant 0 : index
    %c0_4 = arith.constant 0 : index
    %3 = vector.load %arg3[%c0_3, %c0_4] : memref<1x128xf32, #tpu.memory_space<vmem>>, vector<1x128xf32>
    %4 = vector.broadcast %3 : vector<1x128xf32> to vector<8x128xf32>
    %5 = arith.addf %2, %4 : vector<8x128xf32>
    %cst_5 = arith.constant 0.000000e+00 : f32
    %6 = vector.broadcast %cst_5 : f32 to vector<8x128xf32>
    %7 = arith.cmpf oge, %5, %6 : vector<8x128xf32>
    %cst_6 = arith.constant 2.000000e-01 : f32
    %8 = vector.broadcast %cst_6 : f32 to vector<8x128xf32>
    %9 = arith.mulf %8, %5 : vector<8x128xf32>
    %10 = arith.select %7, %5, %9 : vector<8x128xi1>, vector<8x128xf32>
    %c0_7 = arith.constant 0 : index
    %c0_8 = arith.constant 0 : index
    %c0_9 = arith.constant 0 : index
    %11 = vector.load %arg4[%c0_7, %c0_8, %c0_9] : memref<2x128x128xf32, #tpu.memory_space<vmem>>, vector<1x128x128xf32>
    %12 = vector.shape_cast %11 : vector<1x128x128xf32> to vector<128x128xf32>
    %cst_10 = arith.constant dense<0.000000e+00> : vector<8x128xf32>
    %13 = tpu.matmul %10, %12, %cst_10 {dimension_numbers = #tpu.dot_dimension_numbers<[1], [0], [0], [1], [0, 0, 1, 1], [], []>} : vector<8x128xf32>, vector<128x128xf32>, vector<8x128xf32> -> vector<8x128xf32>
    %c0_11 = arith.constant 0 : index
    %c0_12 = arith.constant 0 : index
    %c0_13 = arith.constant 0 : index
    %14 = vector.load %arg5[%c0_11, %c0_12, %c0_13] : memref<2x1x128xf32, #tpu.memory_space<vmem>>, vector<1x1x128xf32>
    %15 = vector.shape_cast %14 : vector<1x1x128xf32> to vector<1x128xf32>
    %16 = vector.broadcast %15 : vector<1x128xf32> to vector<8x128xf32>
    %17 = arith.addf %13, %16 : vector<8x128xf32>
    %cst_14 = arith.constant 0.000000e+00 : f32
    %18 = vector.broadcast %cst_14 : f32 to vector<8x128xf32>
    %19 = arith.cmpf oge, %17, %18 : vector<8x128xf32>
    %cst_15 = arith.constant 2.000000e-01 : f32
    %20 = vector.broadcast %cst_15 : f32 to vector<8x128xf32>
    %21 = arith.mulf %20, %17 : vector<8x128xf32>
    %22 = arith.select %19, %17, %21 : vector<8x128xi1>, vector<8x128xf32>
    %c1 = arith.constant 1 : index
    %c0_16 = arith.constant 0 : index
    %c0_17 = arith.constant 0 : index
    %23 = vector.load %arg4[%c1, %c0_16, %c0_17] : memref<2x128x128xf32, #tpu.memory_space<vmem>>, vector<1x128x128xf32>
    %24 = vector.shape_cast %23 : vector<1x128x128xf32> to vector<128x128xf32>
    %cst_18 = arith.constant dense<0.000000e+00> : vector<8x128xf32>
    %25 = tpu.matmul %22, %24, %cst_18 {dimension_numbers = #tpu.dot_dimension_numbers<[1], [0], [0], [1], [0, 0, 1, 1], [], []>} : vector<8x128xf32>, vector<128x128xf32>, vector<8x128xf32> -> vector<8x128xf32>
    %c1_19 = arith.constant 1 : index
    %c0_20 = arith.constant 0 : index
    %c0_21 = arith.constant 0 : index
    %26 = vector.load %arg5[%c1_19, %c0_20, %c0_21] : memref<2x1x128xf32, #tpu.memory_space<vmem>>, vector<1x1x128xf32>
    %27 = vector.shape_cast %26 : vector<1x1x128xf32> to vector<1x128xf32>
    %28 = vector.broadcast %27 : vector<1x128xf32> to vector<8x128xf32>
    %29 = arith.addf %25, %28 : vector<8x128xf32>
    %cst_22 = arith.constant 0.000000e+00 : f32
    %30 = vector.broadcast %cst_22 : f32 to vector<8x128xf32>
    %31 = arith.cmpf oge, %29, %30 : vector<8x128xf32>
    %cst_23 = arith.constant 2.000000e-01 : f32
    %32 = vector.broadcast %cst_23 : f32 to vector<8x128xf32>
    %33 = arith.mulf %32, %29 : vector<8x128xf32>
    %34 = arith.select %31, %29, %33 : vector<8x128xi1>, vector<8x128xf32>
    %c0_24 = arith.constant 0 : index
    %c0_25 = arith.constant 0 : index
    %35 = vector.load %arg6[%c0_24, %c0_25] : memref<128x128xf32, #tpu.memory_space<vmem>>, vector<128x128xf32>
    %cst_26 = arith.constant dense<0.000000e+00> : vector<8x128xf32>
    %36 = tpu.matmul %34, %35, %cst_26 {dimension_numbers = #tpu.dot_dimension_numbers<[1], [0], [0], [1], [0, 0, 1, 1], [], []>} : vector<8x128xf32>, vector<128x128xf32>, vector<8x128xf32> -> vector<8x128xf32>
    %c0_27 = arith.constant 0 : index
    %c0_28 = arith.constant 0 : index
    %37 = vector.load %arg7[%c0_27, %c0_28] : memref<1x128xf32, #tpu.memory_space<vmem>>, vector<1x128xf32>
    %38 = vector.broadcast %37 : vector<1x128xf32> to vector<8x128xf32>
    %39 = arith.addf %36, %38 : vector<8x128xf32>
    %c0_29 = arith.constant 0 : index
    %c0_30 = arith.constant 0 : index
    %40 = vector.load %arg8[%c0_29, %c0_30] : memref<8x128xf32, #tpu.memory_space<vmem>>, vector<8x128xf32>
    tpu.vector_store %arg8[%c0_29, %c0_30], %39 {strides = array<i32>} : memref<8x128xf32, #tpu.memory_space<vmem>>, vector<8x128xf32>,
    return
  }
  func.func @transform_0(%arg0: i32) -> (i32, i32) {
    %c0_i32 = arith.constant 0 : i32
    %c0_i32_0 = arith.constant 0 : i32
    return %arg0, %c0_i32 : i32, i32
  }
  func.func @transform_1(%arg0: i32) -> (i32, i32) {
    %c0_i32 = arith.constant 0 : i32
    %c0_i32_0 = arith.constant 0 : i32
    %c0_i32_1 = arith.constant 0 : i32
    return %c0_i32, %c0_i32_0 : i32, i32
  }
  func.func @transform_2(%arg0: i32) -> (i32, i32) {
    %c0_i32 = arith.constant 0 : i32
    %c0_i32_0 = arith.constant 0 : i32
    %c0_i32_1 = arith.constant 0 : i32
    return %c0_i32, %c0_i32_0 : i32, i32
  }
  func.func @transform_3(%arg0: i32) -> (i32, i32, i32) {
    %c0_i32 = arith.constant 0 : i32
    %c0_i32_0 = arith.constant 0 : i32
    %c0_i32_1 = arith.constant 0 : i32
    %c0_i32_2 = arith.constant 0 : i32
    return %c0_i32, %c0_i32_0, %c0_i32_1 : i32, i32, i32
  }
  func.func @transform_4(%arg0: i32) -> (i32, i32, i32) {
    %c0_i32 = arith.constant 0 : i32
    %c0_i32_0 = arith.constant 0 : i32
    %c0_i32_1 = arith.constant 0 : i32
    %c0_i32_2 = arith.constant 0 : i32
    return %c0_i32, %c0_i32_0, %c0_i32_1 : i32, i32, i32
  }
  func.func @transform_5(%arg0: i32) -> (i32, i32) {
    %c0_i32 = arith.constant 0 : i32
    %c0_i32_0 = arith.constant 0 : i32
    %c0_i32_1 = arith.constant 0 : i32
    return %c0_i32, %c0_i32_0 : i32, i32
  }
  func.func @transform_6(%arg0: i32) -> (i32, i32) {
    %c0_i32 = arith.constant 0 : i32
    %c0_i32_0 = arith.constant 0 : i32
    %c0_i32_1 = arith.constant 0 : i32
    return %c0_i32, %c0_i32_0 : i32, i32
  }
  func.func @transform_7(%arg0: i32) -> (i32, i32) {
    %c0_i32 = arith.constant 0 : i32
    %c0_i32_0 = arith.constant 0 : i32
    return %arg0, %c0_i32 : i32, i32
  }
}

</mosaic_0001>

<llo_original>
// kernel: tpu_custom_call.1
$region0: #{tpu_custom_call.1}
  #allocation0 [shape = 'u32[]', space=smem, size = 0x4, offset = 0x4, fixed_abs, tag = 'smem constant byte address 0x4 - core index']
  #allocation1 [shape = 'u32[144,128]{1,0:T(1,128)}', space=vmem, size = 0x12000, scoped, tag = 'internal scratch']
  %s0 = inlined_call_operand.hbm [shape: f32[8,128], index: 0, kind: input, shape index: {}]
  %s1 = inlined_call_operand.hbm [shape: f32[128,128], index: 1, kind: input, shape index: {}]
  %s2 = inlined_call_operand.vmem [shape: f32[1,128], index: 2, kind: input, shape index: {}]
  %s3 = inlined_call_operand.hbm [shape: f32[2,128,128], index: 3, kind: input, shape index: {}]
  %s4 = inlined_call_operand.vmem [shape: f32[2,1,128], index: 4, kind: input, shape index: {}]
  %s5 = inlined_call_operand.hbm [shape: f32[128,128], index: 5, kind: input, shape index: {}]
  %s6 = inlined_call_operand.vmem [shape: f32[1,128], index: 6, kind: input, shape index: {}]
  %s7 = inlined_call_operand.hbm [shape: f32[8,128], index: 7, kind: output, shape index: {}]
  %s8 = sld [smem:[#allocation0]]
  $region54: #{tpu_custom_call.1} parent=0
    _
  %s10 = ssub.s32 1, %s8
  %s11 = scalar_select 0, %s10, %s8
  $region1: #{tpu_custom_call.1} parent=0
    #allocation2 [shape = 'u8[4096]{0}', space=vmem, size = 0x1000, scoped, tag = 'input window, operand 0, single buffered']
    #allocation3 [shape = 's32[1]{0}', space=sflag, size = 0x4, scoped, tag = 'scoped memory for tpu_custom_call.1']
    #allocation4 [shape = 's32[1]{0}', space=sflag, size = 0x4, scoped, tag = 'scoped memory for tpu_custom_call.1']
    #allocation5 [shape = 'u8[65536]{0}', space=vmem, size = 0x10000, scoped, tag = 'input window, operand 1, single buffered']
    #allocation6 [shape = 's32[1]{0}', space=sflag, size = 0x4, scoped, tag = 'scoped memory for tpu_custom_call.1']
    #allocation7 [shape = 'u8[131072]{0}', space=vmem, size = 0x20000, scoped, tag = 'input window, operand 3, single buffered']
    #allocation8 [shape = 'u8[65536]{0}', space=vmem, size = 0x10000, scoped, tag = 'input window, operand 5, single buffered']
    #allocation9 [shape = 's32[1]{0}', space=sflag, size = 0x4, scoped, tag = 'scoped memory for tpu_custom_call.1']
    #allocation10 [shape = 'u8[4096]{0}', space=vmem, size = 0x1000, scoped, tag = 'output window, operand 0, single buffered']
    %12 = vsyncpa [#allocation3], 0
    %13 = vsyncpa [#allocation6], 0
    %14 = vsyncpa [#allocation9], 0
    %15 = vsyncpa [#allocation4], 0
    // Predicated region
    $region2: #{tpu_custom_call.1} parent=1 // pred_check
      _
    $region3: #{tpu_custom_call.1} parent=1 // pred_check_branch
      %17 = sbr.rel (0) target = $region5
    $region4: #{tpu_custom_call.1} parent=1 // pred_region
      %s19 = ssub.s32 128, 128
      %20 = vsyncadd [#allocation3], %s19
      %s22 = sshll.u32 [#allocation2], 4
      %s23 = int_to_ptr.vmem [resolvable:$true] %s22
      %25 = dma.hbm_to_vmem [thread:$0]  %s0, 128, %s23, [#allocation3]
    $region5: #{tpu_custom_call.1} parent=1 // pred_fallthru
      _
    // Predicated region
    $region6: #{tpu_custom_call.1} parent=1 // pred_check
      _
    $region7: #{tpu_custom_call.1} parent=1 // pred_check_branch
      %27 = sbr.rel (0) target = $region9
    $region8: #{tpu_custom_call.1} parent=1 // pred_region
      %s29 = ssub.s32 2048, 2048
      %30 = vsyncadd [#allocation6], %s29
      %s31 = sshll.u32 [#allocation5], 4
      %s32 = int_to_ptr.vmem [resolvable:$true] %s31
      %37 = dma.hbm_to_vmem [thread:$0]  %s1, 2048, %s32, [#allocation6], 128, 128, 8
    $region9: #{tpu_custom_call.1} parent=1 // pred_fallthru
      _
    // Predicated region
    $region10: #{tpu_custom_call.1} parent=1 // pred_check
      _
    $region11: #{tpu_custom_call.1} parent=1 // pred_check_branch
      %39 = sbr.rel (0) target = $region13
    $region12: #{tpu_custom_call.1} parent=1 // pred_region
      _
    $region13: #{tpu_custom_call.1} parent=1 // pred_fallthru
      _
    // Predicated region
    $region14: #{tpu_custom_call.1} parent=1 // pred_check
      _
    $region15: #{tpu_custom_call.1} parent=1 // pred_check_branch
      %41 = sbr.rel (0) target = $region17
    $region16: #{tpu_custom_call.1} parent=1 // pred_region
      %s43 = ssub.s32 4096, 4096
      %44 = vsyncadd [#allocation6], %s43
      %s45 = sshll.u32 [#allocation7], 4
      %s46 = int_to_ptr.vmem [resolvable:$true] %s45
      %51 = dma.hbm_to_vmem [thread:$0]  %s3, 4096, %s46, [#allocation6], 128, 128, 8
    $region17: #{tpu_custom_call.1} parent=1 // pred_fallthru
      _
    // Predicated region
    $region18: #{tpu_custom_call.1} parent=1 // pred_check
      _
    $region19: #{tpu_custom_call.1} parent=1 // pred_check_branch
      %53 = sbr.rel (0) target = $region21
    $region20: #{tpu_custom_call.1} parent=1 // pred_region
      _
    $region21: #{tpu_custom_call.1} parent=1 // pred_fallthru
      _
    // Predicated region
    $region22: #{tpu_custom_call.1} parent=1 // pred_check
      _
    $region23: #{tpu_custom_call.1} parent=1 // pred_check_branch
      %55 = sbr.rel (0) target = $region25
    $region24: #{tpu_custom_call.1} parent=1 // pred_region
      %s57 = ssub.s32 2048, 2048
      %58 = vsyncadd [#allocation9], %s57
      %s59 = sshll.u32 [#allocation8], 4
      %s60 = int_to_ptr.vmem [resolvable:$true] %s59
      %65 = dma.hbm_to_vmem [thread:$0]  %s5, 2048, %s60, [#allocation9], 128, 128, 8
    $region25: #{tpu_custom_call.1} parent=1 // pred_fallthru
      _
    // Predicated region
    $region26: #{tpu_custom_call.1} parent=1 // pred_check
      _
    $region27: #{tpu_custom_call.1} parent=1 // pred_check_branch
      %67 = sbr.rel (0) target = $region29
    $region28: #{tpu_custom_call.1} parent=1 // pred_region
      _
    $region29: #{tpu_custom_call.1} parent=1 // pred_fallthru
      _
    // Predicated region
    $region30: #{tpu_custom_call.1} parent=1 // pred_check
      _
    $region31: #{tpu_custom_call.1} parent=1 // pred_check_branch
      %69 = sbr.rel (0) target = $region33
    $region32: #{tpu_custom_call.1} parent=1 // pred_region
      %70 = dma.done [#allocation3], 128
    $region33: #{tpu_custom_call.1} parent=1 // pred_fallthru
      _
    // Predicated region
    $region34: #{tpu_custom_call.1} parent=1 // pred_check
      _
    $region35: #{tpu_custom_call.1} parent=1 // pred_check_branch
      %72 = sbr.rel (0) target = $region37
    $region36: #{tpu_custom_call.1} parent=1 // pred_region
      %73 = dma.done [#allocation6], 2048
    $region37: #{tpu_custom_call.1} parent=1 // pred_fallthru
      _
    // Predicated region
    $region38: #{tpu_custom_call.1} parent=1 // pred_check
      _
    $region39: #{tpu_custom_call.1} parent=1 // pred_check_branch
      %75 = sbr.rel (0) target = $region41
    $region40: #{tpu_custom_call.1} parent=1 // pred_region
      %76 = dma.done [#allocation6], 4096
    $region41: #{tpu_custom_call.1} parent=1 // pred_fallthru
      _
    // Predicated region
    $region42: #{tpu_custom_call.1} parent=1 // pred_check
      _
    $region43: #{tpu_custom_call.1} parent=1 // pred_check_branch
      %78 = sbr.rel (0) target = $region45
    $region44: #{tpu_custom_call.1} parent=1 // pred_region
      %79 = dma.done [#allocation9], 2048
    $region45: #{tpu_custom_call.1} parent=1 // pred_fallthru
      _
    %v80 = vld [vmem:[#allocation2] sm:$0xff]
    %v81 = vld [vmem:[#allocation5] sm:$0xff]
    %v82 = vld [vmem:[#allocation5 + $0x8] sm:$0xff]
    %v83 = vld [vmem:[#allocation5 + $0x10] sm:$0xff]
    %v84 = vld [vmem:[#allocation5 + $0x18] sm:$0xff]
    %v85 = vld [vmem:[#allocation5 + $0x20] sm:$0xff]
    %v86 = vld [vmem:[#allocation5 + $0x28] sm:$0xff]
    %v87 = vld [vmem:[#allocation5 + $0x30] sm:$0xff]
    %v88 = vld [vmem:[#allocation5 + $0x38] sm:$0xff]
    %v89 = vld [vmem:[#allocation5 + $0x40] sm:$0xff]
    %v90 = vld [vmem:[#allocation5 + $0x48] sm:$0xff]
    %v91 = vld [vmem:[#allocation5 + $0x50] sm:$0xff]
    %v92 = vld [vmem:[#allocation5 + $0x58] sm:$0xff]
    %v93 = vld [vmem:[#allocation5 + $0x60] sm:$0xff]
    %v94 = vld [vmem:[#allocation5 + $0x68] sm:$0xff]
    %v95 = vld [vmem:[#allocation5 + $0x70] sm:$0xff]
    %v96 = vld [vmem:[#allocation5 + $0x78] sm:$0xff]
    %v97 = vld [vmem:[%s2] sm:$0x1]
    %v99 = vlaneseq
    %v100 = vshrl.u32 %v99, 7
    %v101 = vsub.s32 0, %v100
    %v102 = vrot.slane %v97, %v101
    %104 = vmatprep.subr.mxu0 0.0
    %105 = vmatpush1.msra.mxu0 %v96
    %106 = vmatprep.subr.mxu0 0.0
    %107 = vmatpush1.msra.mxu0 %v95
    %108 = vmatprep.subr.mxu0 0.0
    %109 = vmatpush1.msra.mxu0 %v94
    %110 = vmatprep.subr.mxu0 0.0
    %111 = vmatpush1.msra.mxu0 %v93
    %112 = vmatprep.subr.mxu0 0.0
    %113 = vmatpush1.msra.mxu0 %v92
    %114 = vmatprep.subr.mxu0 0.0
    %115 = vmatpush1.msra.mxu0 %v91
    %116 = vmatprep.subr.mxu0 0.0
    %117 = vmatpush1.msra.mxu0 %v90
    %118 = vmatprep.subr.mxu0 0.0
    %119 = vmatpush1.msra.mxu0 %v89
    %120 = vmatprep.subr.mxu0 0.0
    %121 = vmatpush1.msra.mxu0 %v88
    %122 = vmatprep.subr.mxu0 0.0
    %123 = vmatpush1.msra.mxu0 %v87
    %124 = vmatprep.subr.mxu0 0.0
    %125 = vmatpush1.msra.mxu0 %v86
    %126 = vmatprep.subr.mxu0 0.0
    %127 = vmatpush1.msra.mxu0 %v85
    %128 = vmatprep.subr.mxu0 0.0
    %129 = vmatpush1.msra.mxu0 %v84
    %130 = vmatprep.subr.mxu0 0.0
    %131 = vmatpush1.msra.mxu0 %v83
    %132 = vmatprep.subr.mxu0 0.0
    %133 = vmatpush1.msra.mxu0 %v82
    %134 = vmatprep.subr.mxu0 0.0
    %135 = vmatpush1.msra.mxu0 %v81
    %136 = vmatprep.subr.mxu0 0.0
    %137 = vmatpush2.msra.mxu0 0.0
    %138 = vmatprep.subr.mxu0 0.0
    %139 = vmatpush2.msra.mxu0 0.0
    %140 = vmatprep.subr.mxu0 0.0
    %141 = vmatpush2.msra.mxu0 0.0
    %142 = vmatprep.subr.mxu0 0.0
    %143 = vmatpush2.msra.mxu0 0.0
    %144 = vmatprep.subr.mxu0 0.0
    %145 = vmatpush2.msra.mxu0 0.0
    %146 = vmatprep.subr.mxu0 0.0
    %147 = vmatpush2.msra.mxu0 0.0
    %148 = vmatprep.subr.mxu0 0.0
    %149 = vmatpush2.msra.mxu0 0.0
    %150 = vmatprep.subr.mxu0 0.0
    %151 = vmatpush2.msra.mxu0 0.0
    %152 = vmatprep.subr.mxu0 0.0
    %153 = vmatpush2.msra.mxu0 0.0
    %154 = vmatprep.subr.mxu0 0.0
    %155 = vmatpush2.msra.mxu0 0.0
    %156 = vmatprep.subr.mxu0 0.0
    %157 = vmatpush2.msra.mxu0 0.0
    %158 = vmatprep.subr.mxu0 0.0
    %159 = vmatpush2.msra.mxu0 0.0
    %160 = vmatprep.subr.mxu0 0.0
    %161 = vmatpush2.msra.mxu0 0.0
    %162 = vmatprep.subr.mxu0 0.0
    %163 = vmatpush2.msra.mxu0 0.0
    %164 = vmatprep.subr.mxu0 0.0
    %165 = vmatpush2.msra.mxu0 0.0
    %166 = vmatprep.subr.mxu0 0.0
    %167 = vmatpush2.msra.mxu0 0.0
    %168 = vmatprep.mubr.f32.mxu0 0.0
    %169 = vmatmul.mubr.f32.gmra.mxu0 %v80
    %v170 = vpop.f32.mrf.mxu0
    %v171 = vadd.f32 %v102, %v170
    %v172 = vpop.f32.mrf.mxu0
    %173 = vdwg.mxu0
    %vm174 = vcmp.ge.f32.partialorder %v171, 0.0
    %v175 = vmul.f32 %v171, 0.2
    %v176 = vsel %vm174, %v171, %v175
    %v177 = vld [vmem:[#allocation7] sm:$0xff]
    %v178 = vld [vmem:[#allocation7 + $0x8] sm:$0xff]
    %v179 = vld [vmem:[#allocation7 + $0x10] sm:$0xff]
    %v180 = vld [vmem:[#allocation7 + $0x18] sm:$0xff]
    %v181 = vld [vmem:[#allocation7 + $0x20] sm:$0xff]
    %v182 = vld [vmem:[#allocation7 + $0x28] sm:$0xff]
    %v183 = vld [vmem:[#allocation7 + $0x30] sm:$0xff]
    %v184 = vld [vmem:[#allocation7 + $0x38] sm:$0xff]
    %v185 = vld [vmem:[#allocation7 + $0x40] sm:$0xff]
    %v186 = vld [vmem:[#allocation7 + $0x48] sm:$0xff]
    %v187 = vld [vmem:[#allocation7 + $0x50] sm:$0xff]
    %v188 = vld [vmem:[#allocation7 + $0x58] sm:$0xff]
    %v189 = vld [vmem:[#allocation7 + $0x60] sm:$0xff]
    %v190 = vld [vmem:[#allocation7 + $0x68] sm:$0xff]
    %v191 = vld [vmem:[#allocation7 + $0x70] sm:$0xff]
    %v192 = vld [vmem:[#allocation7 + $0x78] sm:$0xff]
    %v193 = vld [vmem:[%s4] sm:$0x1]
    %v195 = vlaneseq
    %v196 = vshrl.u32 %v195, 7
    %v197 = vsub.s32 0, %v196
    %v198 = vrot.slane %v193, %v197
    %200 = vmatprep.subr.mxu0 0.0
    %201 = vmatpush1.msra.mxu0 %v192
    %202 = vmatprep.subr.mxu0 0.0
    %203 = vmatpush1.msra.mxu0 %v191
    %204 = vmatprep.subr.mxu0 0.0
    %205 = vmatpush1.msra.mxu0 %v190
    %206 = vmatprep.subr.mxu0 0.0
    %207 = vmatpush1.msra.mxu0 %v189
    %208 = vmatprep.subr.mxu0 0.0
    %209 = vmatpush1.msra.mxu0 %v188
    %210 = vmatprep.subr.mxu0 0.0
    %211 = vmatpush1.msra.mxu0 %v187
    %212 = vmatprep.subr.mxu0 0.0
    %213 = vmatpush1.msra.mxu0 %v186
    %214 = vmatprep.subr.mxu0 0.0
    %215 = vmatpush1.msra.mxu0 %v185
    %216 = vmatprep.subr.mxu0 0.0
    %217 = vmatpush1.msra.mxu0 %v184
    %218 = vmatprep.subr.mxu0 0.0
    %219 = vmatpush1.msra.mxu0 %v183
    %220 = vmatprep.subr.mxu0 0.0
    %221 = vmatpush1.msra.mxu0 %v182
    %222 = vmatprep.subr.mxu0 0.0
    %223 = vmatpush1.msra.mxu0 %v181
    %224 = vmatprep.subr.mxu0 0.0
    %225 = vmatpush1.msra.mxu0 %v180
    %226 = vmatprep.subr.mxu0 0.0
    %227 = vmatpush1.msra.mxu0 %v179
    %228 = vmatprep.subr.mxu0 0.0
    %229 = vmatpush1.msra.mxu0 %v178
    %230 = vmatprep.subr.mxu0 0.0
    %231 = vmatpush1.msra.mxu0 %v177
    %232 = vmatprep.subr.mxu0 0.0
    %233 = vmatpush2.msra.mxu0 0.0
    %234 = vmatprep.subr.mxu0 0.0
    %235 = vmatpush2.msra.mxu0 0.0
    %236 = vmatprep.subr.mxu0 0.0
    %237 = vmatpush2.msra.mxu0 0.0
    %238 = vmatprep.subr.mxu0 0.0
    %239 = vmatpush2.msra.mxu0 0.0
    %240 = vmatprep.subr.mxu0 0.0
    %241 = vmatpush2.msra.mxu0 0.0
    %242 = vmatprep.subr.mxu0 0.0
    %243 = vmatpush2.msra.mxu0 0.0
    %244 = vmatprep.subr.mxu0 0.0
    %245 = vmatpush2.msra.mxu0 0.0
    %246 = vmatprep.subr.mxu0 0.0
    %247 = vmatpush2.msra.mxu0 0.0
    %248 = vmatprep.subr.mxu0 0.0
    %249 = vmatpush2.msra.mxu0 0.0
    %250 = vmatprep.subr.mxu0 0.0
    %251 = vmatpush2.msra.mxu0 0.0
    %252 = vmatprep.subr.mxu0 0.0
    %253 = vmatpush2.msra.mxu0 0.0
    %254 = vmatprep.subr.mxu0 0.0
    %255 = vmatpush2.msra.mxu0 0.0
    %256 = vmatprep.subr.mxu0 0.0
    %257 = vmatpush2.msra.mxu0 0.0
    %258 = vmatprep.subr.mxu0 0.0
    %259 = vmatpush2.msra.mxu0 0.0
    %260 = vmatprep.subr.mxu0 0.0
    %261 = vmatpush2.msra.mxu0 0.0
    %262 = vmatprep.subr.mxu0 0.0
    %263 = vmatpush2.msra.mxu0 0.0
    %264 = vmatprep.mubr.f32.mxu0 0.0
    %265 = vmatmul.mubr.f32.gmra.mxu0 %v176
    %v266 = vpop.f32.mrf.mxu0
    %v267 = vadd.f32 %v198, %v266
    %v268 = vpop.f32.mrf.mxu0
    %269 = vdwg.mxu0
    %vm270 = vcmp.ge.f32.partialorder %v267, 0.0
    %v271 = vmul.f32 %v267, 0.2
    %v272 = vsel %vm270, %v267, %v271
    %s273 = scalar_lea.vmem [#allocation7], 128
    %v274 = vld [vmem:[%s273] sm:$0xff]
    %v275 = vld [vmem:[%s273 + $0x8] sm:$0xff]
    %v276 = vld [vmem:[%s273 + $0x10] sm:$0xff]
    %v277 = vld [vmem:[%s273 + $0x18] sm:$0xff]
    %v278 = vld [vmem:[%s273 + $0x20] sm:$0xff]
    %v279 = vld [vmem:[%s273 + $0x28] sm:$0xff]
    %v280 = vld [vmem:[%s273 + $0x30] sm:$0xff]
    %v281 = vld [vmem:[%s273 + $0x38] sm:$0xff]
    %v282 = vld [vmem:[%s273 + $0x40] sm:$0xff]
    %v283 = vld [vmem:[%s273 + $0x48] sm:$0xff]
    %v284 = vld [vmem:[%s273 + $0x50] sm:$0xff]
    %v285 = vld [vmem:[%s273 + $0x58] sm:$0xff]
    %v286 = vld [vmem:[%s273 + $0x60] sm:$0xff]
    %v287 = vld [vmem:[%s273 + $0x68] sm:$0xff]
    %v288 = vld [vmem:[%s273 + $0x70] sm:$0xff]
    %v289 = vld [vmem:[%s273 + $0x78] sm:$0xff]
    %s290 = scalar_lea.vmem %s4, 1
    %v291 = vld [vmem:[%s290] sm:$0x1]
    %v293 = vlaneseq
    %v294 = vshrl.u32 %v293, 7
    %v295 = vsub.s32 0, %v294
    %v296 = vrot.slane %v291, %v295
    %298 = vmatprep.subr.mxu0 0.0
    %299 = vmatpush1.msra.mxu0 %v289
    %300 = vmatprep.subr.mxu0 0.0
    %301 = vmatpush1.msra.mxu0 %v288
    %302 = vmatprep.subr.mxu0 0.0
    %303 = vmatpush1.msra.mxu0 %v287
    %304 = vmatprep.subr.mxu0 0.0
    %305 = vmatpush1.msra.mxu0 %v286
    %306 = vmatprep.subr.mxu0 0.0
    %307 = vmatpush1.msra.mxu0 %v285
    %308 = vmatprep.subr.mxu0 0.0
    %309 = vmatpush1.msra.mxu0 %v284
    %310 = vmatprep.subr.mxu0 0.0
    %311 = vmatpush1.msra.mxu0 %v283
    %312 = vmatprep.subr.mxu0 0.0
    %313 = vmatpush1.msra.mxu0 %v282
    %314 = vmatprep.subr.mxu0 0.0
    %315 = vmatpush1.msra.mxu0 %v281
    %316 = vmatprep.subr.mxu0 0.0
    %317 = vmatpush1.msra.mxu0 %v280
    %318 = vmatprep.subr.mxu0 0.0
    %319 = vmatpush1.msra.mxu0 %v279
    %320 = vmatprep.subr.mxu0 0.0
    %321 = vmatpush1.msra.mxu0 %v278
    %322 = vmatprep.subr.mxu0 0.0
    %323 = vmatpush1.msra.mxu0 %v277
    %324 = vmatprep.subr.mxu0 0.0
    %325 = vmatpush1.msra.mxu0 %v276
    %326 = vmatprep.subr.mxu0 0.0
    %327 = vmatpush1.msra.mxu0 %v275
    %328 = vmatprep.subr.mxu0 0.0
    %329 = vmatpush1.msra.mxu0 %v274
    %330 = vmatprep.subr.mxu0 0.0
    %331 = vmatpush2.msra.mxu0 0.0
    %332 = vmatprep.subr.mxu0 0.0
    %333 = vmatpush2.msra.mxu0 0.0
    %334 = vmatprep.subr.mxu0 0.0
    %335 = vmatpush2.msra.mxu0 0.0
    %336 = vmatprep.subr.mxu0 0.0
    %337 = vmatpush2.msra.mxu0 0.0
    %338 = vmatprep.subr.mxu0 0.0
    %339 = vmatpush2.msra.mxu0 0.0
    %340 = vmatprep.subr.mxu0 0.0
    %341 = vmatpush2.msra.mxu0 0.0
    %342 = vmatprep.subr.mxu0 0.0
    %343 = vmatpush2.msra.mxu0 0.0
    %344 = vmatprep.subr.mxu0 0.0
    %345 = vmatpush2.msra.mxu0 0.0
    %346 = vmatprep.subr.mxu0 0.0
    %347 = vmatpush2.msra.mxu0 0.0
    %348 = vmatprep.subr.mxu0 0.0
    %349 = vmatpush2.msra.mxu0 0.0
    %350 = vmatprep.subr.mxu0 0.0
    %351 = vmatpush2.msra.mxu0 0.0
    %352 = vmatprep.subr.mxu0 0.0
    %353 = vmatpush2.msra.mxu0 0.0
    %354 = vmatprep.subr.mxu0 0.0
    %355 = vmatpush2.msra.mxu0 0.0
    %356 = vmatprep.subr.mxu0 0.0
    %357 = vmatpush2.msra.mxu0 0.0
    %358 = vmatprep.subr.mxu0 0.0
    %359 = vmatpush2.msra.mxu0 0.0
    %360 = vmatprep.subr.mxu0 0.0
    %361 = vmatpush2.msra.mxu0 0.0
    %362 = vmatprep.mubr.f32.mxu0 0.0
    %363 = vmatmul.mubr.f32.gmra.mxu0 %v272
    %v364 = vpop.f32.mrf.mxu0
    %v365 = vadd.f32 %v296, %v364
    %v366 = vpop.f32.mrf.mxu0
    %367 = vdwg.mxu0
    %vm368 = vcmp.ge.f32.partialorder %v365, 0.0
    %v369 = vmul.f32 %v365, 0.2
    %v370 = vsel %vm368, %v365, %v369
    %v371 = vld [vmem:[#allocation8] sm:$0xff]
    %v372 = vld [vmem:[#allocation8 + $0x8] sm:$0xff]
    %v373 = vld [vmem:[#allocation8 + $0x10] sm:$0xff]
    %v374 = vld [vmem:[#allocation8 + $0x18] sm:$0xff]
    %v375 = vld [vmem:[#allocation8 + $0x20] sm:$0xff]
    %v376 = vld [vmem:[#allocation8 + $0x28] sm:$0xff]
    %v377 = vld [vmem:[#allocation8 + $0x30] sm:$0xff]
    %v378 = vld [vmem:[#allocation8 + $0x38] sm:$0xff]
    %v379 = vld [vmem:[#allocation8 + $0x40] sm:$0xff]
    %v380 = vld [vmem:[#allocation8 + $0x48] sm:$0xff]
    %v381 = vld [vmem:[#allocation8 + $0x50] sm:$0xff]
    %v382 = vld [vmem:[#allocation8 + $0x58] sm:$0xff]
    %v383 = vld [vmem:[#allocation8 + $0x60] sm:$0xff]
    %v384 = vld [vmem:[#allocation8 + $0x68] sm:$0xff]
    %v385 = vld [vmem:[#allocation8 + $0x70] sm:$0xff]
    %v386 = vld [vmem:[#allocation8 + $0x78] sm:$0xff]
    %v387 = vld [vmem:[%s6] sm:$0x1]
    %v389 = vlaneseq
    %v390 = vshrl.u32 %v389, 7
    %v391 = vsub.s32 0, %v390
    %v392 = vrot.slane %v387, %v391
    %394 = vmatprep.subr.mxu0 0.0
    %395 = vmatpush1.msra.mxu0 %v386
    %396 = vmatprep.subr.mxu0 0.0
    %397 = vmatpush1.msra.mxu0 %v385
    %398 = vmatprep.subr.mxu0 0.0
    %399 = vmatpush1.msra.mxu0 %v384
    %400 = vmatprep.subr.mxu0 0.0
    %401 = vmatpush1.msra.mxu0 %v383
    %402 = vmatprep.subr.mxu0 0.0
    %403 = vmatpush1.msra.mxu0 %v382
    %404 = vmatprep.subr.mxu0 0.0
    %405 = vmatpush1.msra.mxu0 %v381
    %406 = vmatprep.subr.mxu0 0.0
    %407 = vmatpush1.msra.mxu0 %v380
    %408 = vmatprep.subr.mxu0 0.0
    %409 = vmatpush1.msra.mxu0 %v379
    %410 = vmatprep.subr.mxu0 0.0
    %411 = vmatpush1.msra.mxu0 %v378
    %412 = vmatprep.subr.mxu0 0.0
    %413 = vmatpush1.msra.mxu0 %v377
    %414 = vmatprep.subr.mxu0 0.0
    %415 = vmatpush1.msra.mxu0 %v376
    %416 = vmatprep.subr.mxu0 0.0
    %417 = vmatpush1.msra.mxu0 %v375
    %418 = vmatprep.subr.mxu0 0.0
    %419 = vmatpush1.msra.mxu0 %v374
    %420 = vmatprep.subr.mxu0 0.0
    %421 = vmatpush1.msra.mxu0 %v373
    %422 = vmatprep.subr.mxu0 0.0
    %423 = vmatpush1.msra.mxu0 %v372
    %424 = vmatprep.subr.mxu0 0.0
    %425 = vmatpush1.msra.mxu0 %v371
    %426 = vmatprep.subr.mxu0 0.0
    %427 = vmatpush2.msra.mxu0 0.0
    %428 = vmatprep.subr.mxu0 0.0
    %429 = vmatpush2.msra.mxu0 0.0
    %430 = vmatprep.subr.mxu0 0.0
    %431 = vmatpush2.msra.mxu0 0.0
    %432 = vmatprep.subr.mxu0 0.0
    %433 = vmatpush2.msra.mxu0 0.0
    %434 = vmatprep.subr.mxu0 0.0
    %435 = vmatpush2.msra.mxu0 0.0
    %436 = vmatprep.subr.mxu0 0.0
    %437 = vmatpush2.msra.mxu0 0.0
    %438 = vmatprep.subr.mxu0 0.0
    %439 = vmatpush2.msra.mxu0 0.0
    %440 = vmatprep.subr.mxu0 0.0
    %441 = vmatpush2.msra.mxu0 0.0
    %442 = vmatprep.subr.mxu0 0.0
    %443 = vmatpush2.msra.mxu0 0.0
    %444 = vmatprep.subr.mxu0 0.0
    %445 = vmatpush2.msra.mxu0 0.0
    %446 = vmatprep.subr.mxu0 0.0
    %447 = vmatpush2.msra.mxu0 0.0
    %448 = vmatprep.subr.mxu0 0.0
    %449 = vmatpush2.msra.mxu0 0.0
    %450 = vmatprep.subr.mxu0 0.0
    %451 = vmatpush2.msra.mxu0 0.0
    %452 = vmatprep.subr.mxu0 0.0
    %453 = vmatpush2.msra.mxu0 0.0
    %454 = vmatprep.subr.mxu0 0.0
    %455 = vmatpush2.msra.mxu0 0.0
    %456 = vmatprep.subr.mxu0 0.0
    %457 = vmatpush2.msra.mxu0 0.0
    %458 = vmatprep.mubr.f32.mxu0 0.0
    %459 = vmatmul.mubr.f32.gmra.mxu0 %v370
    %v460 = vpop.f32.mrf.mxu0
    %v461 = vadd.f32 %v392, %v460
    %v462 = vpop.f32.mrf.mxu0
    %463 = vdwg.mxu0
    %464 = vst [vmem:[#allocation10] sm:$0xff] %v461
    // Predicated region
    $region46: #{tpu_custom_call.1} parent=1 // pred_check
      _
    $region47: #{tpu_custom_call.1} parent=1 // pred_check_branch
      %466 = sbr.rel (0) target = $region49
    $region48: #{tpu_custom_call.1} parent=1 // pred_region
      %s468 = ssub.s32 128, 128
      %469 = vsyncadd [#allocation4], %s468
      %s471 = sshll.u32 [#allocation10], 4
      %s472 = int_to_ptr.vmem [resolvable:$true] %s471
      %474 = dma.vmem_to_hbm [thread:$0]  %s472, 128, %s7, [#allocation4]
    $region49: #{tpu_custom_call.1} parent=1 // pred_fallthru
      _
    // Predicated region
    $region50: #{tpu_custom_call.1} parent=1 // pred_check
      _
    $region51: #{tpu_custom_call.1} parent=1 // pred_check_branch
      %476 = sbr.rel (0) target = $region53
    $region52: #{tpu_custom_call.1} parent=1 // pred_region
      %477 = dma.done [#allocation4], 128
    $region53: #{tpu_custom_call.1} parent=1 // pred_fallthru
      _
    %478 = vsyncpa [#allocation3], 1
    %479 = vsyncpa [#allocation6], 1
    %480 = vsyncpa [#allocation9], 1
    %481 = vsyncpa [#allocation4], 1

</llo_original>
